<compile_context>
chip_gen: v7x
topology: tpu7x:2x2x1
jax: 0.10.0
libtpu: 0.0.40
codegen_flags: <defaults>
</compile_context>

<pallas_src>
import jax
import jax.numpy as jnp
from jax import lax
from jax.experimental import pallas as pl
from jax.experimental.pallas import tpu as pltpu


def _round_up(x, m):
    return ((x + m - 1) // m) * m


def w2v_scores_kernel(center_ref, out_emb_ref, scores_ref):
    # scores tile = center(B_pad, D_pad) . out_tile(TV, D_pad) contracted on D
    # (MXU, f32 accumulation); no transposed RHS is materialized.
    scores_ref[...] = lax.dot_general(
        center_ref[...],
        out_emb_ref[...],
        dimension_numbers=(((1,), (1,)), ((), ())),
        preferred_element_type=jnp.float32,
    ).astype(scores_ref.dtype)


def word2vec_forward(center_word_idx, in_embedding, out_embedding,
                     compute_dtype=jnp.bfloat16):
    B = center_word_idx.shape[0]
    V, D = in_embedding.shape
    assert out_embedding.shape == (V, D)

    # ---- wrapper-side layout plumbing (tiny vs the B*V*D matmul) ----------
    idx = center_word_idx.astype(jnp.int32)
    center = jnp.take(in_embedding, idx, axis=0).astype(compute_dtype)  # (B, D)

    D_pad = max(128, _round_up(D, 128))
    B_pad = max(16, _round_up(B, 16))          # bf16 packs 16 sublanes / vreg
    V_pad = max(128, _round_up(V, 128))

    TV = min(2048, V_pad)                      # lane-aligned vocab tile
    if V_pad >= 2 * TV:
        V_pad = _round_up(V_pad, 2 * TV)       # splittable across 2 TCs (v7x)
        n_cores = 2
    else:
        V_pad = _round_up(V_pad, TV)
        n_cores = 1
    n_inner = (V_pad // TV) // n_cores         # vocab blocks per core

    center = jnp.pad(center, ((0, B_pad - B), (0, D_pad - D)))
    out_emb = jnp.pad(out_embedding.astype(compute_dtype),
                      ((0, V_pad - V), (0, D_pad - D)))

    emb_bytes = jnp.dtype(compute_dtype).itemsize
    cost = pl.CostEstimate(
        flops=2 * B_pad * V_pad * D_pad,
        transcendentals=0,
        bytes_accessed=(V_pad * D_pad + B_pad * D_pad) * emb_bytes
                       + B_pad * V_pad * 4,
    )

    scores_pad = pl.pallas_call(
        w2v_scores_kernel,
        out_shape=jax.ShapeDtypeStruct((B_pad, V_pad), jnp.float32),
        grid_spec=pltpu.PrefetchScalarGridSpec(
            num_scalar_prefetch=0,
            grid=(n_cores, n_inner),
            in_specs=[
                # Center block: constant block index -> DMA'd once per core and
                # kept VMEM-resident across the sequential vocab axis.
                pl.BlockSpec((B_pad, D_pad), lambda c, j: (0, 0)),
                # out_embedding streamed from HBM exactly once overall; each
                # core walks a disjoint range of vocab blocks.
                pl.BlockSpec((TV, D_pad),
                             lambda c, j, n=n_inner: (c * n + j, 0)),
            ],
            out_specs=pl.BlockSpec((B_pad, TV),
                                   lambda c, j, n=n_inner: (0, c * n + j)),
        ),
        compiler_params=pltpu.CompilerParams(
            # Outer axis parallel (uses both TCs on v7x; no-op on v5e/v6e),
            # inner vocab axis sequential.
            dimension_semantics=("parallel", "arbitrary"),
            vmem_limit_bytes=48 * 1024 * 1024,
        ),
        cost_estimate=cost,
    )(center, out_emb)

    return scores_pad[:B, :V]


if __name__ == "__main__":
    # Deterministic synthetic parameters (nn.Parameter(torch.randn(V, D)) analog).
    vocab_size, embedding_dim, batch = 256, 128, 16

    key = jax.random.PRNGKey(0)
    k_in, k_out, k_idx = jax.random.split(key, 3)
    in_embedding = jax.random.normal(k_in, (vocab_size, embedding_dim), dtype=jnp.float32)
    out_embedding = jax.random.normal(k_out, (vocab_size, embedding_dim), dtype=jnp.float32)
    center_word_idx = jax.random.randint(k_idx, (batch,), 0, vocab_size, dtype=jnp.int32)

    scores = word2vec_forward(center_word_idx, in_embedding, out_embedding)
    jax.block_until_ready(scores)

    assert scores.shape == (batch, vocab_size)
    assert scores.dtype == jnp.float32

    # Reference checks: tight vs a bf16-quantized-input reference (same numerics
    # as the kernel's bf16 operands + f32 accumulation), loose vs the pure-f32
    # reference (bf16 input rounding error).
    ref_f32 = in_embedding[center_word_idx] @ out_embedding.T
    ref_bf16 = (in_embedding[center_word_idx].astype(jnp.bfloat16).astype(jnp.float32)
                @ out_embedding.astype(jnp.bfloat16).astype(jnp.float32).T)
    assert jnp.allclose(scores, ref_bf16, atol=1e-2, rtol=1e-2), "mismatch vs bf16 reference"
    assert jnp.allclose(scores, ref_f32, atol=0.5, rtol=5e-2), "mismatch vs f32 reference"

    print("KERNEL_OK")
</pallas_src>

<mosaic_0001>
module attributes {stable_mosaic.version = 11 : i64} {
  func.func @w2v_scores_kernel(%arg0: i32, %arg1: i32, %arg2: memref<16x128xbf16, #tpu.memory_space<vmem>>, %arg3: memref<256x128xbf16, #tpu.memory_space<vmem>>, %arg4: memref<16x256xf32, #tpu.memory_space<vmem>>) attributes {dimension_semantics = [#tpu.dimension_semantics<parallel>, #tpu.dimension_semantics<arbitrary>], iteration_bounds = array<i64: 1, 1>, scalar_prefetch = 0 : i64, scratch_operands = 0 : i64, tpu.core_type = #tpu.core_type<tc>, window_params = [{pipeline_mode = #tpu.pipeline_mode<synchronous>, transform_indices = @transform_0, window_bounds = array<i64: 16, 128>}, {transform_indices = @transform_1, window_bounds = array<i64: 256, 128>}, {transform_indices = @transform_2, window_bounds = array<i64: 16, 256>}]} {
    %c0 = arith.constant 0 : index
    %c0_0 = arith.constant 0 : index
    %0 = vector.load %arg2[%c0, %c0_0] : memref<16x128xbf16, #tpu.memory_space<vmem>>, vector<16x128xbf16>
    %c0_1 = arith.constant 0 : index
    %c0_2 = arith.constant 0 : index
    %1 = vector.load %arg3[%c0_1, %c0_2] : memref<256x128xbf16, #tpu.memory_space<vmem>>, vector<256x128xbf16>
    %cst = arith.constant dense<0.000000e+00> : vector<16x256xf32>
    %2 = tpu.matmul %0, %1, %cst {dimension_numbers = #tpu.dot_dimension_numbers<[1], [1], [0], [0], [0, 0, 1, 0], [], []>} : vector<16x128xbf16>, vector<256x128xbf16>, vector<16x256xf32> -> vector<16x256xf32>
    %c0_3 = arith.constant 0 : index
    %c0_4 = arith.constant 0 : index
    %3 = vector.load %arg4[%c0_3, %c0_4] : memref<16x256xf32, #tpu.memory_space<vmem>>, vector<16x256xf32>
    tpu.vector_store %arg4[%c0_3, %c0_4], %2 {strides = array<i32>} : memref<16x256xf32, #tpu.memory_space<vmem>>, vector<16x256xf32>,
    return
  }
  func.func @transform_0(%arg0: i32, %arg1: i32) -> (i32, i32) {
    %c0_i32 = arith.constant 0 : i32
    %c0_i32_0 = arith.constant 0 : i32
    %c0_i32_1 = arith.constant 0 : i32
    return %c0_i32, %c0_i32_0 : i32, i32
  }
  func.func @transform_1(%arg0: i32, %arg1: i32) -> (i32, i32) {
    %c1_i32 = arith.constant 1 : i32
    %0 = arith.muli %arg0, %c1_i32 : i32
    %1 = arith.addi %0, %arg1 : i32
    %c0_i32 = arith.constant 0 : i32
    %c0_i32_0 = arith.constant 0 : i32
    return %1, %c0_i32 : i32, i32
  }
  func.func @transform_2(%arg0: i32, %arg1: i32) -> (i32, i32) {
    %c1_i32 = arith.constant 1 : i32
    %0 = arith.muli %arg0, %c1_i32 : i32
    %1 = arith.addi %0, %arg1 : i32
    %c0_i32 = arith.constant 0 : i32
    %c0_i32_0 = arith.constant 0 : i32
    return %c0_i32, %1 : i32, i32
  }
}

</mosaic_0001>

<llo_original>
// kernel: tpu_custom_call.1
$region0: #{tpu_custom_call.1}
  #allocation0 [shape = 'u32[]', space=smem, size = 0x4, offset = 0x4, fixed_abs, tag = 'smem constant byte address 0x4 - core index']
  #allocation1 [shape = 'u32[144,128]{1,0:T(1,128)}', space=vmem, size = 0x12000, scoped, tag = 'internal scratch']
  %s0 = inlined_call_operand.hbm [shape: bf16[16,128], index: 0, kind: input, shape index: {}]
  %s1 = inlined_call_operand.hbm [shape: bf16[256,128], index: 1, kind: input, shape index: {}]
  %s2 = inlined_call_operand.hbm [shape: f32[16,256], index: 2, kind: output, shape index: {}]
  %s3 = sld [smem:[#allocation0]]
  $region26: #{tpu_custom_call.1} parent=0
    _
  %s5 = ssub.s32 1, %s3
  %s6 = scalar_select 0, %s5, %s3
  $region1: #{tpu_custom_call.1} parent=0
    #allocation2 [shape = 'u8[4096]{0}', space=vmem, size = 0x1000, scoped, tag = 'input window, operand 0, single buffered']
    #allocation3 [shape = 's32[1]{0}', space=sflag, size = 0x4, scoped, tag = 'scoped memory for tpu_custom_call.1']
    #allocation4 [shape = 's32[1]{0}', space=sflag, size = 0x4, scoped, tag = 'scoped memory for tpu_custom_call.1']
    #allocation5 [shape = 'u8[65536]{0}', space=vmem, size = 0x10000, scoped, tag = 'input window, operand 1, single buffered']
    #allocation6 [shape = 's32[1]{0}', space=sflag, size = 0x4, scoped, tag = 'scoped memory for tpu_custom_call.1']
    #allocation7 [shape = 'u8[16384]{0}', space=vmem, size = 0x4000, scoped, tag = 'output window, operand 0, single buffered']
    %7 = vsyncpa [#allocation3], 0
    %8 = vsyncpa [#allocation6], 0
    %9 = vsyncpa [#allocation4], 0
    // Predicated region
    $region2: #{tpu_custom_call.1} parent=1 // pred_check
      _
    $region3: #{tpu_custom_call.1} parent=1 // pred_check_branch
      %11 = sbr.rel (0) target = $region5
    $region4: #{tpu_custom_call.1} parent=1 // pred_region
      %s13 = ssub.s32 128, 128
      %14 = vsyncadd [#allocation3], %s13
      %s15 = sshll.u32 [#allocation2], 4
      %s16 = int_to_ptr.vmem [resolvable:$true] %s15
      %21 = dma.hbm_to_vmem [thread:$0]  %s0, 128, %s16, [#allocation3], 64, 64, 4
    $region5: #{tpu_custom_call.1} parent=1 // pred_fallthru
      _
    // Predicated region
    $region6: #{tpu_custom_call.1} parent=1 // pred_check
      _
    $region7: #{tpu_custom_call.1} parent=1 // pred_check_branch
      %23 = sbr.rel (0) target = $region9
    $region8: #{tpu_custom_call.1} parent=1 // pred_region
      %s24 = sadd.s32 0, 0
      %s25 = smul.u32 32, %s24
      %s27 = ssub.s32 2048, 2048
      %28 = vsyncadd [#allocation6], %s27
      %s29 = smul.addr %s25, 64
      %s30 = scalar_lea.hbm %s1, %s29
      %s31 = sshll.u32 [#allocation5], 4
      %s32 = int_to_ptr.vmem [resolvable:$true] %s31
      %37 = dma.hbm_to_vmem [thread:$0]  %s30, 2048, %s32, [#allocation6], 64, 64, 4
    $region9: #{tpu_custom_call.1} parent=1 // pred_fallthru
      _
    // Predicated region
    $region10: #{tpu_custom_call.1} parent=1 // pred_check
      _
    $region11: #{tpu_custom_call.1} parent=1 // pred_check_branch
      %39 = sbr.rel (0) target = $region13
    $region12: #{tpu_custom_call.1} parent=1 // pred_region
      %40 = dma.done [#allocation3], 128
    $region13: #{tpu_custom_call.1} parent=1 // pred_fallthru
      _
    // Predicated region
    $region14: #{tpu_custom_call.1} parent=1 // pred_check
      _
    $region15: #{tpu_custom_call.1} parent=1 // pred_check_branch
      %42 = sbr.rel (0) target = $region17
    $region16: #{tpu_custom_call.1} parent=1 // pred_region
      %43 = dma.done [#allocation6], 2048
    $region17: #{tpu_custom_call.1} parent=1 // pred_fallthru
      _
    %s44 = sadd.s32 0, 0
    %s45 = smul.u32 32, %s44
    %s46 = sadd.s32 0, 0
    %s47 = smul.u32 2, %s46
    %v49 = vld [vmem:[#allocation2] sm:$0xf]
    %v50 = vld [vmem:[#allocation2 + $0x4] sm:$0xf]
    %v51 = vld [vmem:[#allocation5] sm:$0xf]
    %v52 = vld [vmem:[#allocation5 + $0x4] sm:$0xf]
    %v53 = vld [vmem:[#allocation5 + $0x8] sm:$0xf]
    %v54 = vld [vmem:[#allocation5 + $0xc] sm:$0xf]
    %v55 = vld [vmem:[#allocation5 + $0x10] sm:$0xf]
    %v56 = vld [vmem:[#allocation5 + $0x14] sm:$0xf]
    %v57 = vld [vmem:[#allocation5 + $0x18] sm:$0xf]
    %v58 = vld [vmem:[#allocation5 + $0x1c] sm:$0xf]
    %v59 = vld [vmem:[#allocation5 + $0x20] sm:$0xf]
    %v60 = vld [vmem:[#allocation5 + $0x24] sm:$0xf]
    %v61 = vld [vmem:[#allocation5 + $0x28] sm:$0xf]
    %v62 = vld [vmem:[#allocation5 + $0x2c] sm:$0xf]
    %v63 = vld [vmem:[#allocation5 + $0x30] sm:$0xf]
    %v64 = vld [vmem:[#allocation5 + $0x34] sm:$0xf]
    %v65 = vld [vmem:[#allocation5 + $0x38] sm:$0xf]
    %v66 = vld [vmem:[#allocation5 + $0x3c] sm:$0xf]
    %v67 = vld [vmem:[#allocation5 + $0x40] sm:$0xf]
    %v68 = vld [vmem:[#allocation5 + $0x44] sm:$0xf]
    %v69 = vld [vmem:[#allocation5 + $0x48] sm:$0xf]
    %v70 = vld [vmem:[#allocation5 + $0x4c] sm:$0xf]
    %v71 = vld [vmem:[#allocation5 + $0x50] sm:$0xf]
    %v72 = vld [vmem:[#allocation5 + $0x54] sm:$0xf]
    %v73 = vld [vmem:[#allocation5 + $0x58] sm:$0xf]
    %v74 = vld [vmem:[#allocation5 + $0x5c] sm:$0xf]
    %v75 = vld [vmem:[#allocation5 + $0x60] sm:$0xf]
    %v76 = vld [vmem:[#allocation5 + $0x64] sm:$0xf]
    %v77 = vld [vmem:[#allocation5 + $0x68] sm:$0xf]
    %v78 = vld [vmem:[#allocation5 + $0x6c] sm:$0xf]
    %v79 = vld [vmem:[#allocation5 + $0x70] sm:$0xf]
    %v80 = vld [vmem:[#allocation5 + $0x74] sm:$0xf]
    %v81 = vld [vmem:[#allocation5 + $0x78] sm:$0xf]
    %v82 = vld [vmem:[#allocation5 + $0x7c] sm:$0xf]
    %v85 = vunpack.c.l.b16 %v49
    %v86 = vunpack.c.l.b16 %v50
    %v87 = vpack.c.b16 %v86, %v85
    %v121 = vunpack.c.l.b16 %v51
    %v122 = vunpack.c.l.b16 %v52
    %v123 = vunpack.c.l.b16 %v53
    %v124 = vunpack.c.l.b16 %v54
    %v125 = vunpack.c.l.b16 %v55
    %v126 = vunpack.c.l.b16 %v56
    %v127 = vunpack.c.l.b16 %v57
    %v128 = vunpack.c.l.b16 %v58
    %v129 = vunpack.c.l.b16 %v59
    %v130 = vunpack.c.l.b16 %v60
    %v131 = vunpack.c.l.b16 %v61
    %v132 = vunpack.c.l.b16 %v62
    %v133 = vunpack.c.l.b16 %v63
    %v134 = vunpack.c.l.b16 %v64
    %v135 = vunpack.c.l.b16 %v65
    %v136 = vunpack.c.l.b16 %v66
    %v137 = vunpack.c.l.b16 %v67
    %v138 = vunpack.c.l.b16 %v68
    %v139 = vunpack.c.l.b16 %v69
    %v140 = vunpack.c.l.b16 %v70
    %v141 = vunpack.c.l.b16 %v71
    %v142 = vunpack.c.l.b16 %v72
    %v143 = vunpack.c.l.b16 %v73
    %v144 = vunpack.c.l.b16 %v74
    %v145 = vunpack.c.l.b16 %v75
    %v146 = vunpack.c.l.b16 %v76
    %v147 = vunpack.c.l.b16 %v77
    %v148 = vunpack.c.l.b16 %v78
    %v149 = vunpack.c.l.b16 %v79
    %v150 = vunpack.c.l.b16 %v80
    %v151 = vunpack.c.l.b16 %v81
    %v152 = vunpack.c.l.b16 %v82
    %v153 = vpack.c.b16 %v122, %v121
    %v154 = vpack.c.b16 %v124, %v123
    %v155 = vpack.c.b16 %v126, %v125
    %v156 = vpack.c.b16 %v128, %v127
    %v157 = vpack.c.b16 %v130, %v129
    %v158 = vpack.c.b16 %v132, %v131
    %v159 = vpack.c.b16 %v134, %v133
    %v160 = vpack.c.b16 %v136, %v135
    %v161 = vpack.c.b16 %v138, %v137
    %v162 = vpack.c.b16 %v140, %v139
    %v163 = vpack.c.b16 %v142, %v141
    %v164 = vpack.c.b16 %v144, %v143
    %v165 = vpack.c.b16 %v146, %v145
    %v166 = vpack.c.b16 %v148, %v147
    %v167 = vpack.c.b16 %v150, %v149
    %v168 = vpack.c.b16 %v152, %v151
    %185 = vmatprep.subr.bf16.mxu0 0
    %186 = vmatpush1.bf16.xpose.msra.mxu0 %v153
    %187 = vmatprep.subr.bf16.mxu0 0
    %188 = vmatpush1.bf16.xpose.msra.mxu0 %v154
    %189 = vmatprep.subr.bf16.mxu0 0
    %190 = vmatpush1.bf16.xpose.msra.mxu0 %v155
    %191 = vmatprep.subr.bf16.mxu0 0
    %192 = vmatpush1.bf16.xpose.msra.mxu0 %v156
    %193 = vmatprep.subr.bf16.mxu0 0
    %194 = vmatpush1.bf16.xpose.msra.mxu0 %v157
    %195 = vmatprep.subr.bf16.mxu0 0
    %196 = vmatpush1.bf16.xpose.msra.mxu0 %v158
    %197 = vmatprep.subr.bf16.mxu0 0
    %198 = vmatpush1.bf16.xpose.msra.mxu0 %v159
    %199 = vmatprep.subr.bf16.mxu0 0
    %200 = vmatpush1.bf16.xpose.msra.mxu0 %v160
    %201 = vmatprep.subr.bf16.mxu0 0
    %202 = vmatpush1.bf16.xpose.msra.mxu0 %v161
    %203 = vmatprep.subr.bf16.mxu0 0
    %204 = vmatpush1.bf16.xpose.msra.mxu0 %v162
    %205 = vmatprep.subr.bf16.mxu0 0
    %206 = vmatpush1.bf16.xpose.msra.mxu0 %v163
    %207 = vmatprep.subr.bf16.mxu0 0
    %208 = vmatpush1.bf16.xpose.msra.mxu0 %v164
    %209 = vmatprep.subr.bf16.mxu0 0
    %210 = vmatpush1.bf16.xpose.msra.mxu0 %v165
    %211 = vmatprep.subr.bf16.mxu0 0
    %212 = vmatpush1.bf16.xpose.msra.mxu0 %v166
    %213 = vmatprep.subr.bf16.mxu0 0
    %214 = vmatpush1.bf16.xpose.msra.mxu0 %v167
    %215 = vmatprep.subr.bf16.mxu0 0
    %216 = vmatpush1.bf16.xpose.msra.mxu0 %v168
    %217 = vmatprep.mubr.bf16.mxu0 0
    %218 = vmatmul.mubr.bf16.gmra.mrb[0].mxu0 %v87
    %v219 = vpop.f32.mrb[0].mxu0
    %v220 = vadd.f32 0.0, %v219
    %v221 = vpop.f32.mrb[0].mxu0
    %v222 = vadd.f32 0.0, %v221
    %v223 = vpop.f32.mrb[0].mxu0
    %v224 = vadd.f32 0.0, %v223
    %v225 = vpop.f32.mrb[0].mxu0
    %v226 = vadd.f32 0.0, %v225
    %227 = vdwg.mxu0
    %228 = vst [vmem:[#allocation7] sm:$0xff] %v220
    %229 = vst [vmem:[#allocation7 + $0x8] sm:$0xff] %v222
    %230 = vst [vmem:[#allocation7 + $0x10] sm:$0xff] %v224
    %231 = vst [vmem:[#allocation7 + $0x18] sm:$0xff] %v226
    // Predicated region
    $region18: #{tpu_custom_call.1} parent=1 // pred_check
      _
    $region19: #{tpu_custom_call.1} parent=1 // pred_check_branch
      %233 = sbr.rel (0) target = $region21
    $region20: #{tpu_custom_call.1} parent=1 // pred_region
      %s234 = sadd.s32 0, 0
      %s235 = smul.u32 2, %s234
      %s237 = ssub.s32 512, 512
      %238 = vsyncadd [#allocation4], %s237
      %s239 = smul.addr %s235, 128
      %s240 = scalar_lea.hbm %s2, %s239
      %s241 = sshll.u32 [#allocation7], 4
      %s242 = int_to_ptr.vmem [resolvable:$true] %s241
      %247 = dma.vmem_to_hbm [thread:$0]  %s242, 512, %s240, [#allocation4], 256, 256, 16
    $region21: #{tpu_custom_call.1} parent=1 // pred_fallthru
      _
    // Predicated region
    $region22: #{tpu_custom_call.1} parent=1 // pred_check
      _
    $region23: #{tpu_custom_call.1} parent=1 // pred_check_branch
      %249 = sbr.rel (0) target = $region25
    $region24: #{tpu_custom_call.1} parent=1 // pred_region
      %250 = dma.done [#allocation4], 512
    $region25: #{tpu_custom_call.1} parent=1 // pred_fallthru
      _
    %251 = vsyncpa [#allocation3], 1
    %252 = vsyncpa [#allocation6], 1
    %253 = vsyncpa [#allocation4], 1

</llo_original>
